<compile_context>
chip_gen: v7x
topology: tpu7x:2x2x1
jax: 0.10.0
libtpu: 0.0.40
codegen_flags: <defaults>
</compile_context>

<pallas_src>
import functools

import jax
import jax.numpy as jnp
from jax.experimental import pallas as pl
from jax.experimental.pallas import tpu as pltpu


def _round_up(x, m):
    return (x + m - 1) // m * m


def conv1d_bn_kernel(x_ref, w_ref, p_ref, o_ref, *, K):
    # x_ref: (N, Cin, L)          input, PyTorch NCL layout, f32
    # w_ref: (K*cpad, Cin)        conv weight, bf16; row dk*cpad + co = weight[co, :, dk],
    #                             rows [dk*cpad+Cout, (dk+1)*cpad) are zero padding
    # p_ref: (Cout, 2)            [:, 0] = BN gamma, [:, 1] = BN beta, f32
    # o_ref: (N, Cout, Lout)      output, PyTorch NCL layout, f32
    N, Cout, Lout = o_ref.shape
    cpad = w_ref.shape[0] // K                         # sublane-padded rows per tap (mult. of 8)

    w = w_ref[...]                                     # (K*cpad, Cin) bf16

    ys = []
    y_acc = jnp.zeros((Cout, Lout), jnp.float32)       # VPU accumulators (no XLU in the loop)
    y2_acc = jnp.zeros((Cout, Lout), jnp.float32)
    for n in range(N):                                 # N = 3, fully unrolled
        xn = x_ref[n].astype(jnp.bfloat16)             # (Cin, L) -> bf16 for single-pass MXU
        # One MXU matmul per sample covers all K taps:
        #   full[dk*cpad + co, j] = sum_ci weight[co, ci, dk] * x[n, ci, j]
        full = jnp.dot(w, xn, preferred_element_type=jnp.float32)       # (K*cpad, L) f32
        # Conv output for sample n: sum the K shifted row blocks.  Row starts 0/cpad/2*cpad
        # are sublane-aligned, so the extracts are near-free views (only the lane shift by dk
        # remains, which is inherent to the conv taps).
        y = full[0:Cout, 0:Lout]
        for dk in range(1, K):
            r = dk * cpad
            y = y + full[r:r + Cout, dk:dk + Lout]                      # (Cout, Lout)
        ys.append(y)
        y_acc = y_acc + y                              # VALU adds ride in free slack
        y2_acc = y2_acc + y * y

    # Training-mode BatchNorm1d forward: biased batch stats over (N, Lout) per channel.
    # Only two cross-lane (XLU) reductions for the whole kernel.
    cnt = float(N * Lout)
    s1 = jnp.sum(y_acc, axis=1, keepdims=True)         # (Cout, 1)
    s2 = jnp.sum(y2_acc, axis=1, keepdims=True)        # (Cout, 1)
    mean = s1 / cnt
    var = jnp.maximum(s2 / cnt - mean * mean, 0.0)     # clamp tiny negative cancellation
    inv = jax.lax.rsqrt(var + 1e-5)                    # EUP
    scale = p_ref[:, 0:1] * inv                        # gamma * inv         (Cout, 1)
    shift = p_ref[:, 1:2] - mean * scale               # beta - mean*scale   (Cout, 1)

    # Single stacked store of the whole output (one FMA pass, NCL layout).
    o_ref[...] = jnp.stack(ys, axis=0) * scale + shift


def prepare_params(weight_ock, bias, gamma, beta):
    """One-time parameter repack (outside the per-call hot path).

    weight_ock: (Cout, Cin, K) PyTorch Conv1d weight layout.
    bias:       (Cout,) — intentionally dropped: a per-channel constant added before
                training-mode BatchNorm is exactly cancelled by the batch-mean subtraction.
    Returns (w_pad (K*cpad, Cin) bf16, gb (Cout, 2) f32, K).
    """
    del bias
    Cout, Cin, K = weight_ock.shape
    cpad = _round_up(Cout, 8)                                   # sublane-align each tap block
    w_koc = jnp.transpose(weight_ock.astype(jnp.float32), (2, 0, 1))    # (K, Cout, Cin)
    w_koc = jnp.pad(w_koc, ((0, 0), (0, cpad - Cout), (0, 0)))          # (K, cpad, Cin)
    w_pad = w_koc.reshape(K * cpad, Cin).astype(jnp.bfloat16)           # bf16 MXU operand
    gb = jnp.stack([gamma.astype(jnp.float32), beta.astype(jnp.float32)], axis=1)  # (Cout, 2)
    return w_pad, gb, K


def conv1d_bn(x_ncl, w_pad, gb, K):
    """x_ncl: (N, Cin, L) f32, PyTorch layout. Returns (N, Cout, Lout), PyTorch layout."""
    N, Cin, L = x_ncl.shape
    Cout = gb.shape[0]
    Lout = L - K + 1

    vmem = pl.BlockSpec(memory_space=pltpu.MemorySpace.VMEM)
    # Single program, no grid: total footprint is a few KB, so any tiling / pipelining /
    # multi-core split (incl. v7x 2-TC) would only add overhead.
    return pl.pallas_call(
        functools.partial(conv1d_bn_kernel, K=K),
        out_shape=jax.ShapeDtypeStruct((N, Cout, Lout), jnp.float32),
        in_specs=[vmem, vmem, vmem],
        out_specs=vmem,
    )(x_ncl, w_pad, gb)


def _reference(x_ncl, weight_ock, bias, gamma, beta):
    """Pure-JAX f32 reference (lax conv + conv bias + training-mode batch-norm)."""
    y = jax.lax.conv_general_dilated(
        x_ncl.astype(jnp.float32), weight_ock.astype(jnp.float32),
        window_strides=(1,), padding="VALID",
        dimension_numbers=("NCH", "OIH", "NCH"))
    y = y + bias[None, :, None]
    mean = jnp.mean(y, axis=(0, 2), keepdims=True)
    var = jnp.mean((y - mean) ** 2, axis=(0, 2), keepdims=True)
    return (y - mean) * jax.lax.rsqrt(var + 1e-5) * gamma[None, :, None] + beta[None, :, None]


if __name__ == "__main__":
    key = jax.random.PRNGKey(0)
    k_x, k_w, k_b = jax.random.split(key, 3)

    N, Cin, L = 3, 10, 12       # matches `x = torch.randn(3, 10, 12)`
    Cout, K = 12, 3             # Conv1d(in=10, out=12, kernel_size=3)

    x = jax.random.normal(k_x, (N, Cin, L), dtype=jnp.float32)
    # Deterministic parameter init (kaiming-uniform-like bound for conv, BN defaults).
    bound = 1.0 / (Cin * K) ** 0.5
    w = jax.random.uniform(k_w, (Cout, Cin, K), jnp.float32, -bound, bound)
    b = jax.random.uniform(k_b, (Cout,), jnp.float32, -bound, bound)
    gamma = jnp.ones((Cout,), jnp.float32)   # BatchNorm1d default weight
    beta = jnp.zeros((Cout,), jnp.float32)   # BatchNorm1d default bias

    w_pad, gb, K_ = prepare_params(w, b, gamma, beta)

    out = conv1d_bn(x, w_pad, gb, K_)
    out = jax.block_until_ready(out)

    # Reference keeps the conv bias (checks the exact bias/BN-mean cancellation) and runs the
    # conv in f32.  The Pallas kernel feeds the MXU bf16 inputs (per review, matches JAX's
    # default TPU matmul precision); post-BN that bounds the error at ~2e-3 rms, so the check
    # uses 2e-2 tolerances — any structural bug (wrong tap/slice/stat/layout) blows far past it.
    ref = _reference(x, w, b, gamma, beta)
    assert out.shape == (N, Cout, L - K + 1)
    assert jnp.allclose(out, ref, rtol=2e-2, atol=2e-2), "mismatch vs reference"

    print("KERNEL_OK")
</pallas_src>

<mosaic_0001>
module attributes {stable_mosaic.version = 11 : i64} {
  func.func @conv1d_bn_kernel(%arg0: memref<3x10x12xf32, #tpu.memory_space<vmem>>, %arg1: memref<48x10xbf16, #tpu.memory_space<vmem>>, %arg2: memref<12x2xf32, #tpu.memory_space<vmem>>, %arg3: memref<3x12x10xf32, #tpu.memory_space<vmem>>) attributes {dimension_semantics = [], scalar_prefetch = 0 : i64, scratch_operands = 0 : i64, tpu.core_type = #tpu.core_type<tc>} {
    %c0 = arith.constant 0 : index
    %c0_0 = arith.constant 0 : index
    %0 = vector.load %arg1[%c0, %c0_0] : memref<48x10xbf16, #tpu.memory_space<vmem>>, vector<48x10xbf16>
    %cst = arith.constant 0.000000e+00 : f32
    %1 = vector.broadcast %cst : f32 to vector<12x10xf32>
    %cst_1 = arith.constant 0.000000e+00 : f32
    %2 = vector.broadcast %cst_1 : f32 to vector<12x10xf32>
    %c0_2 = arith.constant 0 : index
    %c0_3 = arith.constant 0 : index
    %c0_4 = arith.constant 0 : index
    %3 = vector.load %arg0[%c0_2, %c0_3, %c0_4] : memref<3x10x12xf32, #tpu.memory_space<vmem>>, vector<1x10x12xf32>
    %4 = vector.shape_cast %3 : vector<1x10x12xf32> to vector<10x12xf32>
    %5 = arith.truncf %4 : vector<10x12xf32> to vector<10x12xbf16>
    %cst_5 = arith.constant dense<0.000000e+00> : vector<48x12xf32>
    %6 = tpu.matmul %0, %5, %cst_5 {dimension_numbers = #tpu.dot_dimension_numbers<[1], [0], [0], [1], [0, 0, 1, 1], [], []>} : vector<48x10xbf16>, vector<10x12xbf16>, vector<48x12xf32> -> vector<48x12xf32>
    %7 = vector.extract_strided_slice %6 {offsets = [0, 0], sizes = [12, 10], strides = [1, 1]} : vector<48x12xf32> to vector<12x10xf32>
    %8 = vector.extract_strided_slice %6 {offsets = [16, 1], sizes = [12, 10], strides = [1, 1]} : vector<48x12xf32> to vector<12x10xf32>
    %9 = arith.addf %7, %8 : vector<12x10xf32>
    %10 = vector.extract_strided_slice %6 {offsets = [32, 2], sizes = [12, 10], strides = [1, 1]} : vector<48x12xf32> to vector<12x10xf32>
    %11 = arith.addf %9, %10 : vector<12x10xf32>
    %12 = arith.addf %1, %11 : vector<12x10xf32>
    %13 = arith.mulf %11, %11 : vector<12x10xf32>
    %14 = arith.addf %2, %13 : vector<12x10xf32>
    %c1 = arith.constant 1 : index
    %c0_6 = arith.constant 0 : index
    %c0_7 = arith.constant 0 : index
    %15 = vector.load %arg0[%c1, %c0_6, %c0_7] : memref<3x10x12xf32, #tpu.memory_space<vmem>>, vector<1x10x12xf32>
    %16 = vector.shape_cast %15 : vector<1x10x12xf32> to vector<10x12xf32>
    %17 = arith.truncf %16 : vector<10x12xf32> to vector<10x12xbf16>
    %cst_8 = arith.constant dense<0.000000e+00> : vector<48x12xf32>
    %18 = tpu.matmul %0, %17, %cst_8 {dimension_numbers = #tpu.dot_dimension_numbers<[1], [0], [0], [1], [0, 0, 1, 1], [], []>} : vector<48x10xbf16>, vector<10x12xbf16>, vector<48x12xf32> -> vector<48x12xf32>
    %19 = vector.extract_strided_slice %18 {offsets = [0, 0], sizes = [12, 10], strides = [1, 1]} : vector<48x12xf32> to vector<12x10xf32>
    %20 = vector.extract_strided_slice %18 {offsets = [16, 1], sizes = [12, 10], strides = [1, 1]} : vector<48x12xf32> to vector<12x10xf32>
    %21 = arith.addf %19, %20 : vector<12x10xf32>
    %22 = vector.extract_strided_slice %18 {offsets = [32, 2], sizes = [12, 10], strides = [1, 1]} : vector<48x12xf32> to vector<12x10xf32>
    %23 = arith.addf %21, %22 : vector<12x10xf32>
    %24 = arith.addf %12, %23 : vector<12x10xf32>
    %25 = arith.mulf %23, %23 : vector<12x10xf32>
    %26 = arith.addf %14, %25 : vector<12x10xf32>
    %c2 = arith.constant 2 : index
    %c0_9 = arith.constant 0 : index
    %c0_10 = arith.constant 0 : index
    %27 = vector.load %arg0[%c2, %c0_9, %c0_10] : memref<3x10x12xf32, #tpu.memory_space<vmem>>, vector<1x10x12xf32>
    %28 = vector.shape_cast %27 : vector<1x10x12xf32> to vector<10x12xf32>
    %29 = arith.truncf %28 : vector<10x12xf32> to vector<10x12xbf16>
    %cst_11 = arith.constant dense<0.000000e+00> : vector<48x12xf32>
    %30 = tpu.matmul %0, %29, %cst_11 {dimension_numbers = #tpu.dot_dimension_numbers<[1], [0], [0], [1], [0, 0, 1, 1], [], []>} : vector<48x10xbf16>, vector<10x12xbf16>, vector<48x12xf32> -> vector<48x12xf32>
    %31 = vector.extract_strided_slice %30 {offsets = [0, 0], sizes = [12, 10], strides = [1, 1]} : vector<48x12xf32> to vector<12x10xf32>
    %32 = vector.extract_strided_slice %30 {offsets = [16, 1], sizes = [12, 10], strides = [1, 1]} : vector<48x12xf32> to vector<12x10xf32>
    %33 = arith.addf %31, %32 : vector<12x10xf32>
    %34 = vector.extract_strided_slice %30 {offsets = [32, 2], sizes = [12, 10], strides = [1, 1]} : vector<48x12xf32> to vector<12x10xf32>
    %35 = arith.addf %33, %34 : vector<12x10xf32>
    %36 = arith.addf %24, %35 : vector<12x10xf32>
    %37 = arith.mulf %35, %35 : vector<12x10xf32>
    %38 = arith.addf %26, %37 : vector<12x10xf32>
    %cst_12 = arith.constant dense<0.000000e+00> : vector<12xf32>
    %39 = vector.multi_reduction <add>, %36, %cst_12 [1] : vector<12x10xf32> to vector<12xf32>
    %40 = vector.shape_cast %39 : vector<12xf32> to vector<12x1xf32>
    %cst_13 = arith.constant dense<0.000000e+00> : vector<12xf32>
    %41 = vector.multi_reduction <add>, %38, %cst_13 [1] : vector<12x10xf32> to vector<12xf32>
    %42 = vector.shape_cast %41 : vector<12xf32> to vector<12x1xf32>
    %cst_14 = arith.constant 3.000000e+01 : f32
    %43 = vector.broadcast %cst_14 : f32 to vector<12x1xf32>
    %44 = arith.divf %40, %43 : vector<12x1xf32>
    %cst_15 = arith.constant 3.000000e+01 : f32
    %45 = vector.broadcast %cst_15 : f32 to vector<12x1xf32>
    %46 = arith.divf %42, %45 : vector<12x1xf32>
    %47 = arith.mulf %44, %44 : vector<12x1xf32>
    %48 = arith.subf %46, %47 : vector<12x1xf32>
    %cst_16 = arith.constant 0.000000e+00 : f32
    %49 = vector.broadcast %cst_16 : f32 to vector<12x1xf32>
    %50 = arith.maximumf %48, %49 : vector<12x1xf32>
    %cst_17 = arith.constant 9.99999974E-6 : f32
    %51 = vector.broadcast %cst_17 : f32 to vector<12x1xf32>
    %52 = arith.addf %50, %51 : vector<12x1xf32>
    %53 = math.rsqrt %52 : vector<12x1xf32>
    %c0_18 = arith.constant 0 : index
    %c0_19 = arith.constant 0 : index
    %54 = vector.load %arg2[%c0_18, %c0_19] : memref<12x2xf32, #tpu.memory_space<vmem>>, vector<12x1xf32>
    %55 = arith.mulf %54, %53 : vector<12x1xf32>
    %c0_20 = arith.constant 0 : index
    %c1_21 = arith.constant 1 : index
    %56 = vector.load %arg2[%c0_20, %c1_21] : memref<12x2xf32, #tpu.memory_space<vmem>>, vector<12x1xf32>
    %57 = arith.mulf %44, %55 : vector<12x1xf32>
    %58 = arith.subf %56, %57 : vector<12x1xf32>
    %59 = vector.shape_cast %11 : vector<12x10xf32> to vector<1x12x10xf32>
    %60 = vector.shape_cast %23 : vector<12x10xf32> to vector<1x12x10xf32>
    %61 = vector.shape_cast %35 : vector<12x10xf32> to vector<1x12x10xf32>
    %62 = tpu.concatenate %59, %60, %61 in 0 : vector<1x12x10xf32>, vector<1x12x10xf32>, vector<1x12x10xf32> -> vector<3x12x10xf32>
    %63 = vector.shape_cast %55 : vector<12x1xf32> to vector<1x12x1xf32>
    %64 = vector.broadcast %63 : vector<1x12x1xf32> to vector<3x12x10xf32>
    %65 = arith.mulf %62, %64 : vector<3x12x10xf32>
    %66 = vector.shape_cast %58 : vector<12x1xf32> to vector<1x12x1xf32>
    %67 = vector.broadcast %66 : vector<1x12x1xf32> to vector<3x12x10xf32>
    %68 = arith.addf %65, %67 : vector<3x12x10xf32>
    %c0_22 = arith.constant 0 : index
    %c0_23 = arith.constant 0 : index
    %c0_24 = arith.constant 0 : index
    %69 = vector.load %arg3[%c0_22, %c0_23, %c0_24] : memref<3x12x10xf32, #tpu.memory_space<vmem>>, vector<3x12x10xf32>
    tpu.vector_store %arg3[%c0_22, %c0_23, %c0_24], %68 {strides = array<i32>} : memref<3x12x10xf32, #tpu.memory_space<vmem>>, vector<3x12x10xf32>,
    return
  }
}

</mosaic_0001>

<llo_original>
// kernel: tpu_custom_call.1
$region0: #{tpu_custom_call.1}
  #allocation0 [shape = 'u32[]', space=smem, size = 0x4, offset = 0x4, fixed_abs, tag = 'smem constant byte address 0x4 - core index']
  #allocation1 [shape = 'u32[144,128]{1,0:T(1,128)}', space=vmem, size = 0x12000, scoped, tag = 'internal scratch']
  %s0 = inlined_call_operand.vmem [shape: f32[3,10,12], index: 0, kind: input, shape index: {}]
  %s1 = inlined_call_operand.vmem [shape: bf16[48,10], index: 1, kind: input, shape index: {}]
  %s2 = inlined_call_operand.vmem [shape: f32[12,2], index: 2, kind: input, shape index: {}]
  %s3 = inlined_call_operand.vmem [shape: f32[3,12,10], index: 3, kind: output, shape index: {}]
  %s4 = sld [smem:[#allocation0]]
  $region22: #{tpu_custom_call.1} parent=0
    _
  %s6 = ssub.s32 1, %s4
  %s7 = scalar_select 0, %s6, %s4
  // Predicated region
  $region2: #{tpu_custom_call.1} parent=0 // pred_check
    _
  $region3: #{tpu_custom_call.1} parent=0 // pred_check_branch
    %9 = sbr.rel (0) target = $region5
  $region4: #{tpu_custom_call.1} parent=0 // pred_region
    _
  $region5: #{tpu_custom_call.1} parent=0 // pred_fallthru
    _
  // Predicated region
  $region6: #{tpu_custom_call.1} parent=0 // pred_check
    _
  $region7: #{tpu_custom_call.1} parent=0 // pred_check_branch
    %11 = sbr.rel (0) target = $region9
  $region8: #{tpu_custom_call.1} parent=0 // pred_region
    _
  $region9: #{tpu_custom_call.1} parent=0 // pred_fallthru
    _
  // Predicated region
  $region10: #{tpu_custom_call.1} parent=0 // pred_check
    _
  $region11: #{tpu_custom_call.1} parent=0 // pred_check_branch
    %13 = sbr.rel (0) target = $region13
  $region12: #{tpu_custom_call.1} parent=0 // pred_region
    _
  $region13: #{tpu_custom_call.1} parent=0 // pred_fallthru
    _
  %v15 = vld [vmem:[%s1] sm:$0xf]
  %v16 = vld [vmem:[%s1 + $0x4] sm:$0xf]
  %v17 = vld [vmem:[%s1 + $0x8] sm:$0xf]
  %v18 = vld [vmem:[%s1 + $0xc] sm:$0xf]
  %v19 = vld [vmem:[%s1 + $0x10] sm:$0xf]
  %v20 = vld [vmem:[%s1 + $0x14] sm:$0xf]
  %v21 = vld [vmem:[%s0] sm:$0xff]
  %v22 = vld [vmem:[%s0 + $0x8] sm:$0x3]
  %v23 = vpack.c.bf16 %v22, %v21
  %v30 = vunpack.c.l.b16 %v15
  %v31 = vunpack.c.l.b16 %v16
  %v32 = vunpack.c.l.b16 %v17
  %v33 = vunpack.c.l.b16 %v18
  %v34 = vunpack.c.l.b16 %v19
  %v35 = vunpack.c.l.b16 %v20
  %v36 = vpack.c.b16 %v31, %v30
  %v37 = vpack.c.b16 %v33, %v32
  %v38 = vpack.c.b16 %v35, %v34
  %vm39 = vcmask 80896
  %v41 = vsel %vm39, %v36, 0
  %v44 = vsel %vm39, %v37, 0
  %v47 = vsel %vm39, %v38, 0
  %vm49 = vcmask 1044480
  %v51 = vsel %vm49, %v23, 0
  %53 = vmatprep.subr.bf16.mxu0 0
  %54 = vmatpush1.bf16.msra.mxu0 %v51
  %55 = vmatprep.subr.bf16.mxu0 0
  %56 = vmatpush1.bf16.msra.mxu0 0
  %57 = vmatprep.subr.bf16.mxu0 0
  %58 = vmatpush1.bf16.msra.mxu0 0
  %59 = vmatprep.subr.bf16.mxu0 0
  %60 = vmatpush1.bf16.msra.mxu0 0
  %61 = vmatprep.subr.bf16.mxu0 0
  %62 = vmatpush1.bf16.msra.mxu0 0
  %63 = vmatprep.subr.bf16.mxu0 0
  %64 = vmatpush1.bf16.msra.mxu0 0
  %65 = vmatprep.subr.bf16.mxu0 0
  %66 = vmatpush1.bf16.msra.mxu0 0
  %67 = vmatprep.subr.bf16.mxu0 0
  %68 = vmatpush1.bf16.msra.mxu0 0
  %69 = vmatprep.subr.bf16.mxu0 0
  %70 = vmatpush1.bf16.msra.mxu0 0
  %71 = vmatprep.subr.bf16.mxu0 0
  %72 = vmatpush1.bf16.msra.mxu0 0
  %73 = vmatprep.subr.bf16.mxu0 0
  %74 = vmatpush1.bf16.msra.mxu0 0
  %75 = vmatprep.subr.bf16.mxu0 0
  %76 = vmatpush1.bf16.msra.mxu0 0
  %77 = vmatprep.subr.bf16.mxu0 0
  %78 = vmatpush1.bf16.msra.mxu0 0
  %79 = vmatprep.subr.bf16.mxu0 0
  %80 = vmatpush1.bf16.msra.mxu0 0
  %81 = vmatprep.subr.bf16.mxu0 0
  %82 = vmatpush1.bf16.msra.mxu0 0
  %83 = vmatprep.subr.bf16.mxu0 0
  %84 = vmatpush1.bf16.msra.mxu0 0
  %85 = vmatprep.mubr.bf16.mxu0 0
  %86 = vmatmul.mubr.bf16.gmra.mrb[0].mxu0 %v41
  %v87 = vpop.f32.mrb[0].mxu0
  %v88 = vadd.f32 0.0, %v87
  %v89 = vpop.f32.mrb[0].mxu0
  %v90 = vpop.f32.mrb[0].mxu0
  %v91 = vadd.f32 0.0, %v90
  %v92 = vpop.f32.mrb[0].mxu0
  %93 = vmatprep.mubr.bf16.mxu0 0
  %94 = vmatmul.mubr.bf16.gmra.mrb[0].mxu0 %v44
  %v95 = vpop.f32.mrb[0].mxu0
  %v96 = vadd.f32 0.0, %v95
  %v97 = vpop.f32.mrb[0].mxu0
  %v98 = vpop.f32.mrb[0].mxu0
  %v99 = vadd.f32 0.0, %v98
  %v100 = vpop.f32.mrb[0].mxu0
  %101 = vmatprep.mubr.bf16.mxu0 0
  %102 = vmatmul.mubr.bf16.gmra.mrb[0].mxu0 %v47
  %v103 = vpop.f32.mrb[0].mxu0
  %v104 = vadd.f32 0.0, %v103
  %v105 = vpop.f32.mrb[0].mxu0
  %v106 = vpop.f32.mrb[0].mxu0
  %v107 = vadd.f32 0.0, %v106
  %v108 = vpop.f32.mrb[0].mxu0
  %109 = vdwg.mxu0
  %112 = vrot.lane.b32.xlu0 %v96, 127
  %v113 = vpop.permute.xlu0 %112
  %114 = vrot.lane.b32.xlu0 %v99, 127
  %v115 = vpop.permute.xlu0 %114
  %v118 = vadd.f32 %v88, %v113
  %v119 = vadd.f32 %v91, %v115
  %122 = vrot.lane.b32.xlu0 %v104, 126
  %v123 = vpop.permute.xlu0 %122
  %124 = vrot.lane.b32.xlu0 %v107, 126
  %v125 = vpop.permute.xlu0 %124
  %v128 = vadd.f32 %v118, %v123
  %v129 = vadd.f32 %v119, %v125
  %v130 = vadd.f32 %v128, 0.0
  %v131 = vadd.f32 %v129, 0.0
  %v132 = vmul.f32 %v128, %v128
  %v133 = vmul.f32 %v129, %v129
  %v134 = vadd.f32 %v132, 0.0
  %v135 = vadd.f32 %v133, 0.0
  %s136 = scalar_lea.vmem %s0, 16
  %v137 = vld [vmem:[%s136] sm:$0xff]
  %v138 = vld [vmem:[%s136 + $0x8] sm:$0x3]
  %v139 = vpack.c.bf16 %v138, %v137
  %v141 = vsel %vm49, %v139, 0
  %143 = vmatprep.subr.bf16.mxu0 0
  %144 = vmatpush1.bf16.msra.mxu0 %v141
  %145 = vmatprep.subr.bf16.mxu0 0
  %146 = vmatpush1.bf16.msra.mxu0 0
  %147 = vmatprep.subr.bf16.mxu0 0
  %148 = vmatpush1.bf16.msra.mxu0 0
  %149 = vmatprep.subr.bf16.mxu0 0
  %150 = vmatpush1.bf16.msra.mxu0 0
  %151 = vmatprep.subr.bf16.mxu0 0
  %152 = vmatpush1.bf16.msra.mxu0 0
  %153 = vmatprep.subr.bf16.mxu0 0
  %154 = vmatpush1.bf16.msra.mxu0 0
  %155 = vmatprep.subr.bf16.mxu0 0
  %156 = vmatpush1.bf16.msra.mxu0 0
  %157 = vmatprep.subr.bf16.mxu0 0
  %158 = vmatpush1.bf16.msra.mxu0 0
  %159 = vmatprep.subr.bf16.mxu0 0
  %160 = vmatpush1.bf16.msra.mxu0 0
  %161 = vmatprep.subr.bf16.mxu0 0
  %162 = vmatpush1.bf16.msra.mxu0 0
  %163 = vmatprep.subr.bf16.mxu0 0
  %164 = vmatpush1.bf16.msra.mxu0 0
  %165 = vmatprep.subr.bf16.mxu0 0
  %166 = vmatpush1.bf16.msra.mxu0 0
  %167 = vmatprep.subr.bf16.mxu0 0
  %168 = vmatpush1.bf16.msra.mxu0 0
  %169 = vmatprep.subr.bf16.mxu0 0
  %170 = vmatpush1.bf16.msra.mxu0 0
  %171 = vmatprep.subr.bf16.mxu0 0
  %172 = vmatpush1.bf16.msra.mxu0 0
  %173 = vmatprep.subr.bf16.mxu0 0
  %174 = vmatpush1.bf16.msra.mxu0 0
  %175 = vmatprep.mubr.bf16.mxu0 0
  %176 = vmatmul.mubr.bf16.gmra.mrb[0].mxu0 %v41
  %v177 = vpop.f32.mrb[0].mxu0
  %v178 = vadd.f32 0.0, %v177
  %v179 = vpop.f32.mrb[0].mxu0
  %v180 = vpop.f32.mrb[0].mxu0
  %v181 = vadd.f32 0.0, %v180
  %v182 = vpop.f32.mrb[0].mxu0
  %183 = vmatprep.mubr.bf16.mxu0 0
  %184 = vmatmul.mubr.bf16.gmra.mrb[0].mxu0 %v44
  %v185 = vpop.f32.mrb[0].mxu0
  %v186 = vadd.f32 0.0, %v185
  %v187 = vpop.f32.mrb[0].mxu0
  %v188 = vpop.f32.mrb[0].mxu0
  %v189 = vadd.f32 0.0, %v188
  %v190 = vpop.f32.mrb[0].mxu0
  %191 = vmatprep.mubr.bf16.mxu0 0
  %192 = vmatmul.mubr.bf16.gmra.mrb[0].mxu0 %v47
  %v193 = vpop.f32.mrb[0].mxu0
  %v194 = vadd.f32 0.0, %v193
  %v195 = vpop.f32.mrb[0].mxu0
  %v196 = vpop.f32.mrb[0].mxu0
  %v197 = vadd.f32 0.0, %v196
  %v198 = vpop.f32.mrb[0].mxu0
  %199 = vdwg.mxu0
  %202 = vrot.lane.b32.xlu0 %v186, 127
  %v203 = vpop.permute.xlu0 %202
  %204 = vrot.lane.b32.xlu0 %v189, 127
  %v205 = vpop.permute.xlu0 %204
  %v208 = vadd.f32 %v178, %v203
  %v209 = vadd.f32 %v181, %v205
  %212 = vrot.lane.b32.xlu0 %v194, 126
  %v213 = vpop.permute.xlu0 %212
  %214 = vrot.lane.b32.xlu0 %v197, 126
  %v215 = vpop.permute.xlu0 %214
  %v218 = vadd.f32 %v208, %v213
  %v219 = vadd.f32 %v209, %v215
  %v220 = vadd.f32 %v130, %v218
  %v221 = vadd.f32 %v131, %v219
  %v222 = vmul.f32 %v218, %v218
  %v223 = vmul.f32 %v219, %v219
  %v224 = vadd.f32 %v134, %v222
  %v225 = vadd.f32 %v135, %v223
  %s226 = scalar_lea.vmem %s0, 32
  %v227 = vld [vmem:[%s226] sm:$0xff]
  %v228 = vld [vmem:[%s226 + $0x8] sm:$0x3]
  %v229 = vpack.c.bf16 %v228, %v227
  %v231 = vsel %vm49, %v229, 0
  %233 = vmatprep.subr.bf16.mxu0 0
  %234 = vmatpush1.bf16.msra.mxu0 %v231
  %235 = vmatprep.subr.bf16.mxu0 0
  %236 = vmatpush1.bf16.msra.mxu0 0
  %237 = vmatprep.subr.bf16.mxu0 0
  %238 = vmatpush1.bf16.msra.mxu0 0
  %239 = vmatprep.subr.bf16.mxu0 0
  %240 = vmatpush1.bf16.msra.mxu0 0
  %241 = vmatprep.subr.bf16.mxu0 0
  %242 = vmatpush1.bf16.msra.mxu0 0
  %243 = vmatprep.subr.bf16.mxu0 0
  %244 = vmatpush1.bf16.msra.mxu0 0
  %245 = vmatprep.subr.bf16.mxu0 0
  %246 = vmatpush1.bf16.msra.mxu0 0
  %247 = vmatprep.subr.bf16.mxu0 0
  %248 = vmatpush1.bf16.msra.mxu0 0
  %249 = vmatprep.subr.bf16.mxu0 0
  %250 = vmatpush1.bf16.msra.mxu0 0
  %251 = vmatprep.subr.bf16.mxu0 0
  %252 = vmatpush1.bf16.msra.mxu0 0
  %253 = vmatprep.subr.bf16.mxu0 0
  %254 = vmatpush1.bf16.msra.mxu0 0
  %255 = vmatprep.subr.bf16.mxu0 0
  %256 = vmatpush1.bf16.msra.mxu0 0
  %257 = vmatprep.subr.bf16.mxu0 0
  %258 = vmatpush1.bf16.msra.mxu0 0
  %259 = vmatprep.subr.bf16.mxu0 0
  %260 = vmatpush1.bf16.msra.mxu0 0
  %261 = vmatprep.subr.bf16.mxu0 0
  %262 = vmatpush1.bf16.msra.mxu0 0
  %263 = vmatprep.subr.bf16.mxu0 0
  %264 = vmatpush1.bf16.msra.mxu0 0
  %265 = vmatprep.mubr.bf16.mxu0 0
  %266 = vmatmul.mubr.bf16.gmra.mrb[0].mxu0 %v41
  %v267 = vpop.f32.mrb[0].mxu0
  %v268 = vadd.f32 0.0, %v267
  %v269 = vpop.f32.mrb[0].mxu0
  %v270 = vpop.f32.mrb[0].mxu0
  %v271 = vadd.f32 0.0, %v270
  %v272 = vpop.f32.mrb[0].mxu0
  %273 = vmatprep.mubr.bf16.mxu0 0
  %274 = vmatmul.mubr.bf16.gmra.mrb[0].mxu0 %v44
  %v275 = vpop.f32.mrb[0].mxu0
  %v276 = vadd.f32 0.0, %v275
  %v277 = vpop.f32.mrb[0].mxu0
  %v278 = vpop.f32.mrb[0].mxu0
  %v279 = vadd.f32 0.0, %v278
  %v280 = vpop.f32.mrb[0].mxu0
  %281 = vmatprep.mubr.bf16.mxu0 0
  %282 = vmatmul.mubr.bf16.gmra.mrb[0].mxu0 %v47
  %v283 = vpop.f32.mrb[0].mxu0
  %v284 = vadd.f32 0.0, %v283
  %v285 = vpop.f32.mrb[0].mxu0
  %v286 = vpop.f32.mrb[0].mxu0
  %v287 = vadd.f32 0.0, %v286
  %v288 = vpop.f32.mrb[0].mxu0
  %289 = vdwg.mxu0
  %292 = vrot.lane.b32.xlu0 %v276, 127
  %v293 = vpop.permute.xlu0 %292
  %294 = vrot.lane.b32.xlu0 %v279, 127
  %v295 = vpop.permute.xlu0 %294
  %v298 = vadd.f32 %v268, %v293
  %v299 = vadd.f32 %v271, %v295
  %302 = vrot.lane.b32.xlu0 %v284, 126
  %v303 = vpop.permute.xlu0 %302
  %304 = vrot.lane.b32.xlu0 %v287, 126
  %v305 = vpop.permute.xlu0 %304
  %v308 = vadd.f32 %v298, %v303
  %v309 = vadd.f32 %v299, %v305
  %v310 = vadd.f32 %v220, %v308
  %v311 = vadd.f32 %v221, %v309
  %v312 = vmul.f32 %v308, %v308
  %v313 = vmul.f32 %v309, %v309
  %v314 = vadd.f32 %v224, %v312
  %v315 = vadd.f32 %v225, %v313
  %v316 = vsel %vm39, %v310, 0.0
  %317 = vadd.xlane.f32.xlu0 %v316
  %v318 = vpop.xlane.xlu0 %317
  %vm319 = vcmask 76800
  %v320 = vsel %vm319, %v311, 0.0
  %321 = vadd.xlane.f32.xlu0 %v320
  %v322 = vpop.xlane.xlu0 %321
  %v323 = vsel %vm39, %v314, 0.0
  %324 = vadd.xlane.f32.xlu0 %v323
  %v325 = vpop.xlane.xlu0 %324
  %v326 = vsel %vm319, %v315, 0.0
  %327 = vadd.xlane.f32.xlu0 %v326
  %v328 = vpop.xlane.xlu0 %327
  %v329 = vrcp.pop 30.0
  %v330 = vmul.f32 %v318, %v329
  %v331 = vmul.f32 %v322, %v329
  %v332 = vmul.f32 %v325, %v329
  %v333 = vmul.f32 %v328, %v329
  %v334 = vmul.f32 %v330, %v330
  %v335 = vmul.f32 %v331, %v331
  %v336 = vsub.f32 %v332, %v334
  %v337 = vsub.f32 %v333, %v335
  %v338 = vmax.f32 %v336, 0.0
  %v339 = vmax.f32 %v337, 0.0
  %v340 = vadd.f32 %v338, 1e-05
  %v341 = vadd.f32 %v339, 1e-05
  %v342 = vrsqrt.pop %v340
  %v343 = vrsqrt.pop %v341
  %v344 = vld [vmem:[%s2] sm:$0xff]
  %v345 = vld [vmem:[%s2 + $0x8] sm:$0xf]
  %v346 = vmul.f32 %v344, %v342
  %v347 = vmul.f32 %v345, %v343
  %v348 = vmul.f32 %v330, %v346
  %v349 = vmul.f32 %v331, %v347
  %352 = vrot.lane.b32.xlu0 %v348, 1
  %v353 = vpop.permute.xlu0 %352
  %354 = vrot.lane.b32.xlu0 %v349, 1
  %v355 = vpop.permute.xlu0 %354
  %v358 = vsub.f32 %v344, %v353
  %v359 = vsub.f32 %v345, %v355
  %361 = vset.pattern.permute.xlu0 0
  %362 = vperm.xlu0 %361, %v346
  %v363 = vpop.permute.xlu0 %362
  %366 = vset.pattern.permute.xlu0 0
  %367 = vperm.xlu0 %366, %v347
  %v368 = vpop.permute.xlu0 %367
  %v370 = vmul.f32 %v128, %v363
  %v371 = vmul.f32 %v129, %v368
  %v372 = vmul.f32 %v218, %v363
  %v373 = vmul.f32 %v219, %v368
  %v374 = vmul.f32 %v308, %v363
  %v375 = vmul.f32 %v309, %v368
  %377 = vset.pattern.permute.xlu0 1
  %378 = vperm.xlu0 %377, %v358
  %v379 = vpop.permute.xlu0 %378
  %382 = vset.pattern.permute.xlu0 1
  %383 = vperm.xlu0 %382, %v359
  %v384 = vpop.permute.xlu0 %383
  %v386 = vadd.f32 %v370, %v379
  %v387 = vadd.f32 %v371, %v384
  %v388 = vadd.f32 %v372, %v379
  %v389 = vadd.f32 %v373, %v384
  %v390 = vadd.f32 %v374, %v379
  %v391 = vadd.f32 %v375, %v384
  %392 = vst.msk [vmem:[%s3] sm:$0xff] %vm39, %v386
  %393 = vst.msk [vmem:[%s3 + $0x8] sm:$0xf] %vm319, %v387
  %394 = vst.msk [vmem:[%s3 + $0x10] sm:$0xff] %vm39, %v388
  %395 = vst.msk [vmem:[%s3 + $0x18] sm:$0xf] %vm319, %v389
  %396 = vst.msk [vmem:[%s3 + $0x20] sm:$0xff] %vm39, %v390
  %397 = vst.msk [vmem:[%s3 + $0x28] sm:$0xf] %vm319, %v391
  // Predicated region
  $region14: #{tpu_custom_call.1} parent=0 // pred_check
    _
  $region15: #{tpu_custom_call.1} parent=0 // pred_check_branch
    %399 = sbr.rel (0) target = $region17
  $region16: #{tpu_custom_call.1} parent=0 // pred_region
    _
  $region17: #{tpu_custom_call.1} parent=0 // pred_fallthru
    _
  // Predicated region
  $region18: #{tpu_custom_call.1} parent=0 // pred_check
    _
  $region19: #{tpu_custom_call.1} parent=0 // pred_check_branch
    %401 = sbr.rel (0) target = $region21
  $region20: #{tpu_custom_call.1} parent=0 // pred_region
    _
  $region21: #{tpu_custom_call.1} parent=0 // pred_fallthru
    _

</llo_original>
